<compile_context>
chip_gen: v7x
topology: tpu7x:2x2x1
jax: 0.10.0
libtpu: 0.0.40
codegen_flags: <defaults>
</compile_context>

<pallas_src>
import jax
import jax.numpy as jnp
from jax.experimental import pallas as pl
from jax.experimental.pallas import tpu as pltpu


def _pool_fc_kernel(x_ref, w_ref, b_ref, o_ref):
    # x_ref: (tb, HW, C)  channels-last, lane-dense
    # w_ref: (C, N_pad)   fc_weight.T pre-scaled by 1/(H*W), N padded to 128
    # b_ref: (1, N_pad)   bias, N padded to 128
    # o_ref: (tb, N_pad)
    x = x_ref[...]
    # Sublane-axis sum over HW; accumulate in f32 (keeps v5e off the emulated
    # bf16 VPU path if inputs are ever bf16), then feed the MXU in x's dtype.
    pooled = jnp.sum(x, axis=1, dtype=jnp.float32).astype(x.dtype)      # (tb, C)
    out = jnp.dot(pooled, w_ref[...], preferred_element_type=jnp.float32)
    o_ref[...] = (out + b_ref[...].astype(jnp.float32)).astype(o_ref.dtype)


def resnet_back_forward(x_nchw, fc_weight, fc_bias, *, batch_tile=None):
    """x_nchw: (B, C, H, W); fc_weight: (num_classes, C); fc_bias: (num_classes,)."""
    B, C, H, W = x_nchw.shape
    HW = H * W
    N = fc_weight.shape[0]
    N_pad = ((N + 127) // 128) * 128          # lane-dense output width

    # Channels-last layout so C sits on the lane axis.
    x3 = jnp.transpose(x_nchw.reshape(B, C, HW), (0, 2, 1))             # (B, HW, C)

    # Fold 1/(H*W) into the weight; pad N to a multiple of 128.
    w_scaled = (fc_weight.T.astype(x_nchw.dtype)) * (1.0 / HW)          # (C, N)
    w_p = jnp.zeros((C, N_pad), w_scaled.dtype).at[:, :N].set(w_scaled)
    b_p = jnp.zeros((1, N_pad), x_nchw.dtype).at[0, :N].set(
        fc_bias.astype(x_nchw.dtype))

    # Batch tiling: single block at toy sizes; tile (and run "parallel" for the
    # two v7x TensorCores) only when the caller asks for it at realistic B.
    tb = B if batch_tile is None else min(batch_tile, B)
    grid = (pl.cdiv(B, tb),)

    out_padded = pl.pallas_call(
        _pool_fc_kernel,
        out_shape=jax.ShapeDtypeStruct((B, N_pad), x_nchw.dtype),
        grid_spec=pltpu.PrefetchScalarGridSpec(
            num_scalar_prefetch=0,
            grid=grid,
            in_specs=[
                pl.BlockSpec((tb, HW, C), lambda i: (i, 0, 0)),
                pl.BlockSpec((C, N_pad), lambda i: (0, 0)),   # weight stays resident
                pl.BlockSpec((1, N_pad), lambda i: (0, 0)),   # bias stays resident
            ],
            out_specs=pl.BlockSpec((tb, N_pad), lambda i: (i, 0)),
        ),
        compiler_params=pltpu.CompilerParams(
            dimension_semantics=("parallel",),
        ),
    )(x3, w_p, b_p)

    return out_padded[:, :N]


if __name__ == "__main__":
    # config='18' -> in_feat = 512; num_classes = 10; small 4x4 spatial map.
    B, C, H, W = 2, 512, 4, 4
    NUM_CLASSES = 10

    key = jax.random.PRNGKey(0)
    kx, kw, kb = jax.random.split(key, 3)

    x = jax.random.normal(kx, (B, C, H, W), dtype=jnp.float32)
    # Deterministic init mimicking nn.Linear's uniform(-1/sqrt(C), 1/sqrt(C)).
    bound = 1.0 / jnp.sqrt(jnp.float32(C))
    fc_weight = jax.random.uniform(kw, (NUM_CLASSES, C), jnp.float32, -bound, bound)
    fc_bias = jax.random.uniform(kb, (NUM_CLASSES,), jnp.float32, -bound, bound)

    out = resnet_back_forward(x, fc_weight, fc_bias)
    out = jax.block_until_ready(out)

    # Reference (same math as the PyTorch forward, B > 1 squeeze case).
    ref = jnp.mean(x, axis=(2, 3)) @ fc_weight.T + fc_bias
    assert out.shape == (B, NUM_CLASSES)
    assert jnp.allclose(out, ref, atol=1e-4, rtol=1e-4)

    print("KERNEL_OK")
</pallas_src>

<mosaic_0001>
module attributes {stable_mosaic.version = 11 : i64} {
  func.func @_pool_fc_kernel(%arg0: i32, %arg1: memref<2x16x512xf32, #tpu.memory_space<vmem>>, %arg2: memref<512x128xf32, #tpu.memory_space<vmem>>, %arg3: memref<1x128xf32, #tpu.memory_space<vmem>>, %arg4: memref<2x128xf32, #tpu.memory_space<vmem>>) attributes {dimension_semantics = [#tpu.dimension_semantics<parallel>], iteration_bounds = array<i64: 1>, scalar_prefetch = 0 : i64, scratch_operands = 0 : i64, tpu.core_type = #tpu.core_type<tc>, window_params = [{transform_indices = @transform_0, window_bounds = array<i64: 2, 16, 512>}, {pipeline_mode = #tpu.pipeline_mode<synchronous>, transform_indices = @transform_1, window_bounds = array<i64: 512, 128>}, {pipeline_mode = #tpu.pipeline_mode<synchronous>, transform_indices = @transform_2, window_bounds = array<i64: 1, 128>}, {transform_indices = @transform_3, window_bounds = array<i64: 2, 128>}]} {
    %c0 = arith.constant 0 : index
    %c0_0 = arith.constant 0 : index
    %c0_1 = arith.constant 0 : index
    %0 = vector.load %arg1[%c0, %c0_0, %c0_1] : memref<2x16x512xf32, #tpu.memory_space<vmem>>, vector<2x16x512xf32>
    %cst = arith.constant dense<0.000000e+00> : vector<2x512xf32>
    %1 = vector.multi_reduction <add>, %0, %cst [1] : vector<2x16x512xf32> to vector<2x512xf32>
    %c0_2 = arith.constant 0 : index
    %c0_3 = arith.constant 0 : index
    %2 = vector.load %arg2[%c0_2, %c0_3] : memref<512x128xf32, #tpu.memory_space<vmem>>, vector<512x128xf32>
    %cst_4 = arith.constant dense<0.000000e+00> : vector<2x128xf32>
    %3 = tpu.matmul %1, %2, %cst_4 {dimension_numbers = #tpu.dot_dimension_numbers<[1], [0], [0], [1], [0, 0, 1, 1], [], []>} : vector<2x512xf32>, vector<512x128xf32>, vector<2x128xf32> -> vector<2x128xf32>
    %c0_5 = arith.constant 0 : index
    %c0_6 = arith.constant 0 : index
    %4 = vector.load %arg3[%c0_5, %c0_6] : memref<1x128xf32, #tpu.memory_space<vmem>>, vector<1x128xf32>
    %5 = vector.broadcast %4 : vector<1x128xf32> to vector<2x128xf32>
    %6 = arith.addf %3, %5 : vector<2x128xf32>
    %c0_7 = arith.constant 0 : index
    %c0_8 = arith.constant 0 : index
    %7 = vector.load %arg4[%c0_7, %c0_8] : memref<2x128xf32, #tpu.memory_space<vmem>>, vector<2x128xf32>
    tpu.vector_store %arg4[%c0_7, %c0_8], %6 {strides = array<i32>} : memref<2x128xf32, #tpu.memory_space<vmem>>, vector<2x128xf32>,
    return
  }
  func.func @transform_0(%arg0: i32) -> (i32, i32, i32) {
    %c0_i32 = arith.constant 0 : i32
    %c0_i32_0 = arith.constant 0 : i32
    %c0_i32_1 = arith.constant 0 : i32
    return %arg0, %c0_i32, %c0_i32_0 : i32, i32, i32
  }
  func.func @transform_1(%arg0: i32) -> (i32, i32) {
    %c0_i32 = arith.constant 0 : i32
    %c0_i32_0 = arith.constant 0 : i32
    %c0_i32_1 = arith.constant 0 : i32
    return %c0_i32, %c0_i32_0 : i32, i32
  }
  func.func @transform_2(%arg0: i32) -> (i32, i32) {
    %c0_i32 = arith.constant 0 : i32
    %c0_i32_0 = arith.constant 0 : i32
    %c0_i32_1 = arith.constant 0 : i32
    return %c0_i32, %c0_i32_0 : i32, i32
  }
  func.func @transform_3(%arg0: i32) -> (i32, i32) {
    %c0_i32 = arith.constant 0 : i32
    %c0_i32_0 = arith.constant 0 : i32
    return %arg0, %c0_i32 : i32, i32
  }
}

</mosaic_0001>

<llo_original>
// kernel: tpu_custom_call.1
$region0: #{tpu_custom_call.1}
  #allocation0 [shape = 'u32[]', space=smem, size = 0x4, offset = 0x4, fixed_abs, tag = 'smem constant byte address 0x4 - core index']
  #allocation1 [shape = 'u32[144,128]{1,0:T(1,128)}', space=vmem, size = 0x12000, scoped, tag = 'internal scratch']
  %s0 = inlined_call_operand.hbm [shape: f32[2,16,512], index: 0, kind: input, shape index: {}]
  %s1 = inlined_call_operand.hbm [shape: f32[512,128], index: 1, kind: input, shape index: {}]
  %s2 = inlined_call_operand.vmem [shape: f32[1,128], index: 2, kind: input, shape index: {}]
  %s3 = inlined_call_operand.hbm [shape: f32[2,128], index: 3, kind: output, shape index: {}]
  %s4 = sld [smem:[#allocation0]]
  $region30: #{tpu_custom_call.1} parent=0
    _
  %s6 = ssub.s32 1, %s4
  %s7 = scalar_select 0, %s6, %s4
  $region1: #{tpu_custom_call.1} parent=0
    #allocation2 [shape = 'u8[65536]{0}', space=vmem, size = 0x10000, scoped, tag = 'input window, operand 0, single buffered']
    #allocation3 [shape = 's32[1]{0}', space=sflag, size = 0x4, scoped, tag = 'scoped memory for tpu_custom_call.1']
    #allocation4 [shape = 's32[1]{0}', space=sflag, size = 0x4, scoped, tag = 'scoped memory for tpu_custom_call.1']
    #allocation5 [shape = 'u8[262144]{0}', space=vmem, size = 0x40000, scoped, tag = 'input window, operand 1, single buffered']
    #allocation6 [shape = 's32[1]{0}', space=sflag, size = 0x4, scoped, tag = 'scoped memory for tpu_custom_call.1']
    #allocation7 [shape = 'u8[1024]{0}', space=vmem, size = 0x400, scoped, tag = 'output window, operand 0, single buffered']
    %8 = vsyncpa [#allocation3], 0
    %9 = vsyncpa [#allocation6], 0
    %10 = vsyncpa [#allocation4], 0
    // Predicated region
    $region2: #{tpu_custom_call.1} parent=1 // pred_check
      _
    $region3: #{tpu_custom_call.1} parent=1 // pred_check_branch
      %12 = sbr.rel (0) target = $region5
    $region4: #{tpu_custom_call.1} parent=1 // pred_region
      %s14 = ssub.s32 2048, 2048
      %15 = vsyncadd [#allocation3], %s14
      %s16 = sshll.u32 [#allocation2], 4
      %s17 = int_to_ptr.vmem [resolvable:$true] %s16
      %22 = dma.hbm_to_vmem [thread:$0]  %s0, 2048, %s17, [#allocation3], 512, 512, 32
    $region5: #{tpu_custom_call.1} parent=1 // pred_fallthru
      _
    // Predicated region
    $region6: #{tpu_custom_call.1} parent=1 // pred_check
      _
    $region7: #{tpu_custom_call.1} parent=1 // pred_check_branch
      %24 = sbr.rel (0) target = $region9
    $region8: #{tpu_custom_call.1} parent=1 // pred_region
      %s26 = ssub.s32 8192, 8192
      %27 = vsyncadd [#allocation6], %s26
      %s28 = sshll.u32 [#allocation5], 4
      %s29 = int_to_ptr.vmem [resolvable:$true] %s28
      %34 = dma.hbm_to_vmem [thread:$0]  %s1, 8192, %s29, [#allocation6], 128, 128, 8
    $region9: #{tpu_custom_call.1} parent=1 // pred_fallthru
      _
    // Predicated region
    $region10: #{tpu_custom_call.1} parent=1 // pred_check
      _
    $region11: #{tpu_custom_call.1} parent=1 // pred_check_branch
      %36 = sbr.rel (0) target = $region13
    $region12: #{tpu_custom_call.1} parent=1 // pred_region
      _
    $region13: #{tpu_custom_call.1} parent=1 // pred_fallthru
      _
    // Predicated region
    $region14: #{tpu_custom_call.1} parent=1 // pred_check
      _
    $region15: #{tpu_custom_call.1} parent=1 // pred_check_branch
      %38 = sbr.rel (0) target = $region17
    $region16: #{tpu_custom_call.1} parent=1 // pred_region
      %39 = dma.done [#allocation3], 2048
    $region17: #{tpu_custom_call.1} parent=1 // pred_fallthru
      _
    // Predicated region
    $region18: #{tpu_custom_call.1} parent=1 // pred_check
      _
    $region19: #{tpu_custom_call.1} parent=1 // pred_check_branch
      %41 = sbr.rel (0) target = $region21
    $region20: #{tpu_custom_call.1} parent=1 // pred_region
      %42 = dma.done [#allocation6], 8192
    $region21: #{tpu_custom_call.1} parent=1 // pred_fallthru
      _
    %v43 = vld [vmem:[#allocation2] sm:$0xff]
    %v44 = vld [vmem:[#allocation2 + $0x8] sm:$0xff]
    %v45 = vld [vmem:[#allocation2 + $0x10] sm:$0xff]
    %v46 = vld [vmem:[#allocation2 + $0x18] sm:$0xff]
    %v47 = vld [vmem:[#allocation2 + $0x20] sm:$0xff]
    %v48 = vld [vmem:[#allocation2 + $0x28] sm:$0xff]
    %v49 = vld [vmem:[#allocation2 + $0x30] sm:$0xff]
    %v50 = vld [vmem:[#allocation2 + $0x38] sm:$0xff]
    %v51 = vld [vmem:[#allocation2 + $0x40] sm:$0xff]
    %v52 = vld [vmem:[#allocation2 + $0x48] sm:$0xff]
    %v53 = vld [vmem:[#allocation2 + $0x50] sm:$0xff]
    %v54 = vld [vmem:[#allocation2 + $0x58] sm:$0xff]
    %v55 = vld [vmem:[#allocation2 + $0x60] sm:$0xff]
    %v56 = vld [vmem:[#allocation2 + $0x68] sm:$0xff]
    %v57 = vld [vmem:[#allocation2 + $0x70] sm:$0xff]
    %v58 = vld [vmem:[#allocation2 + $0x78] sm:$0xff]
    %v59 = vadd.f32 %v43, %v47
    %v60 = vrot.slane %v59, 4
    %v61 = vadd.f32 %v59, %v60
    %v62 = vrot.slane %v61, 2
    %v63 = vadd.f32 %v61, %v62
    %v64 = vrot.slane %v63, 1
    %v65 = vadd.f32 %v63, %v64
    %v66 = vadd.f32 %v44, %v48
    %v67 = vrot.slane %v66, 4
    %v68 = vadd.f32 %v66, %v67
    %v69 = vrot.slane %v68, 2
    %v70 = vadd.f32 %v68, %v69
    %v71 = vrot.slane %v70, 1
    %v72 = vadd.f32 %v70, %v71
    %v73 = vadd.f32 %v45, %v49
    %v74 = vrot.slane %v73, 4
    %v75 = vadd.f32 %v73, %v74
    %v76 = vrot.slane %v75, 2
    %v77 = vadd.f32 %v75, %v76
    %v78 = vrot.slane %v77, 1
    %v79 = vadd.f32 %v77, %v78
    %v80 = vadd.f32 %v46, %v50
    %v81 = vrot.slane %v80, 4
    %v82 = vadd.f32 %v80, %v81
    %v83 = vrot.slane %v82, 2
    %v84 = vadd.f32 %v82, %v83
    %v85 = vrot.slane %v84, 1
    %v86 = vadd.f32 %v84, %v85
    %v87 = vadd.f32 %v51, %v55
    %v88 = vrot.slane %v87, 4
    %v89 = vadd.f32 %v87, %v88
    %v90 = vrot.slane %v89, 2
    %v91 = vadd.f32 %v89, %v90
    %v92 = vrot.slane %v91, 1
    %v93 = vadd.f32 %v91, %v92
    %v94 = vadd.f32 %v52, %v56
    %v95 = vrot.slane %v94, 4
    %v96 = vadd.f32 %v94, %v95
    %v97 = vrot.slane %v96, 2
    %v98 = vadd.f32 %v96, %v97
    %v99 = vrot.slane %v98, 1
    %v100 = vadd.f32 %v98, %v99
    %v101 = vadd.f32 %v53, %v57
    %v102 = vrot.slane %v101, 4
    %v103 = vadd.f32 %v101, %v102
    %v104 = vrot.slane %v103, 2
    %v105 = vadd.f32 %v103, %v104
    %v106 = vrot.slane %v105, 1
    %v107 = vadd.f32 %v105, %v106
    %v108 = vadd.f32 %v54, %v58
    %v109 = vrot.slane %v108, 4
    %v110 = vadd.f32 %v108, %v109
    %v111 = vrot.slane %v110, 2
    %v112 = vadd.f32 %v110, %v111
    %v113 = vrot.slane %v112, 1
    %v114 = vadd.f32 %v112, %v113
    %v115 = vld [vmem:[#allocation5] sm:$0xff]
    %v116 = vld [vmem:[#allocation5 + $0x8] sm:$0xff]
    %v117 = vld [vmem:[#allocation5 + $0x10] sm:$0xff]
    %v118 = vld [vmem:[#allocation5 + $0x18] sm:$0xff]
    %v119 = vld [vmem:[#allocation5 + $0x20] sm:$0xff]
    %v120 = vld [vmem:[#allocation5 + $0x28] sm:$0xff]
    %v121 = vld [vmem:[#allocation5 + $0x30] sm:$0xff]
    %v122 = vld [vmem:[#allocation5 + $0x38] sm:$0xff]
    %v123 = vld [vmem:[#allocation5 + $0x40] sm:$0xff]
    %v124 = vld [vmem:[#allocation5 + $0x48] sm:$0xff]
    %v125 = vld [vmem:[#allocation5 + $0x50] sm:$0xff]
    %v126 = vld [vmem:[#allocation5 + $0x58] sm:$0xff]
    %v127 = vld [vmem:[#allocation5 + $0x60] sm:$0xff]
    %v128 = vld [vmem:[#allocation5 + $0x68] sm:$0xff]
    %v129 = vld [vmem:[#allocation5 + $0x70] sm:$0xff]
    %v130 = vld [vmem:[#allocation5 + $0x78] sm:$0xff]
    %v131 = vld [vmem:[#allocation5 + $0x80] sm:$0xff]
    %v132 = vld [vmem:[#allocation5 + $0x88] sm:$0xff]
    %v133 = vld [vmem:[#allocation5 + $0x90] sm:$0xff]
    %v134 = vld [vmem:[#allocation5 + $0x98] sm:$0xff]
    %v135 = vld [vmem:[#allocation5 + $0xa0] sm:$0xff]
    %v136 = vld [vmem:[#allocation5 + $0xa8] sm:$0xff]
    %v137 = vld [vmem:[#allocation5 + $0xb0] sm:$0xff]
    %v138 = vld [vmem:[#allocation5 + $0xb8] sm:$0xff]
    %v139 = vld [vmem:[#allocation5 + $0xc0] sm:$0xff]
    %v140 = vld [vmem:[#allocation5 + $0xc8] sm:$0xff]
    %v141 = vld [vmem:[#allocation5 + $0xd0] sm:$0xff]
    %v142 = vld [vmem:[#allocation5 + $0xd8] sm:$0xff]
    %v143 = vld [vmem:[#allocation5 + $0xe0] sm:$0xff]
    %v144 = vld [vmem:[#allocation5 + $0xe8] sm:$0xff]
    %v145 = vld [vmem:[#allocation5 + $0xf0] sm:$0xff]
    %v146 = vld [vmem:[#allocation5 + $0xf8] sm:$0xff]
    %v147 = vld [vmem:[#allocation5 + $0x100] sm:$0xff]
    %v148 = vld [vmem:[#allocation5 + $0x108] sm:$0xff]
    %v149 = vld [vmem:[#allocation5 + $0x110] sm:$0xff]
    %v150 = vld [vmem:[#allocation5 + $0x118] sm:$0xff]
    %v151 = vld [vmem:[#allocation5 + $0x120] sm:$0xff]
    %v152 = vld [vmem:[#allocation5 + $0x128] sm:$0xff]
    %v153 = vld [vmem:[#allocation5 + $0x130] sm:$0xff]
    %v154 = vld [vmem:[#allocation5 + $0x138] sm:$0xff]
    %v155 = vld [vmem:[#allocation5 + $0x140] sm:$0xff]
    %v156 = vld [vmem:[#allocation5 + $0x148] sm:$0xff]
    %v157 = vld [vmem:[#allocation5 + $0x150] sm:$0xff]
    %v158 = vld [vmem:[#allocation5 + $0x158] sm:$0xff]
    %v159 = vld [vmem:[#allocation5 + $0x160] sm:$0xff]
    %v160 = vld [vmem:[#allocation5 + $0x168] sm:$0xff]
    %v161 = vld [vmem:[#allocation5 + $0x170] sm:$0xff]
    %v162 = vld [vmem:[#allocation5 + $0x178] sm:$0xff]
    %v163 = vld [vmem:[#allocation5 + $0x180] sm:$0xff]
    %v164 = vld [vmem:[#allocation5 + $0x188] sm:$0xff]
    %v165 = vld [vmem:[#allocation5 + $0x190] sm:$0xff]
    %v166 = vld [vmem:[#allocation5 + $0x198] sm:$0xff]
    %v167 = vld [vmem:[#allocation5 + $0x1a0] sm:$0xff]
    %v168 = vld [vmem:[#allocation5 + $0x1a8] sm:$0xff]
    %v169 = vld [vmem:[#allocation5 + $0x1b0] sm:$0xff]
    %v170 = vld [vmem:[#allocation5 + $0x1b8] sm:$0xff]
    %v171 = vld [vmem:[#allocation5 + $0x1c0] sm:$0xff]
    %v172 = vld [vmem:[#allocation5 + $0x1c8] sm:$0xff]
    %v173 = vld [vmem:[#allocation5 + $0x1d0] sm:$0xff]
    %v174 = vld [vmem:[#allocation5 + $0x1d8] sm:$0xff]
    %v175 = vld [vmem:[#allocation5 + $0x1e0] sm:$0xff]
    %v176 = vld [vmem:[#allocation5 + $0x1e8] sm:$0xff]
    %v177 = vld [vmem:[#allocation5 + $0x1f0] sm:$0xff]
    %v178 = vld [vmem:[#allocation5 + $0x1f8] sm:$0xff]
    %v179 = vld [vmem:[%s2] sm:$0x1]
    %v181 = vlaneseq
    %v182 = vshrl.u32 %v181, 7
    %v183 = vsub.s32 0, %v182
    %v184 = vrot.slane %v179, %v183
    %vm194 = vcmask 1041409
    %v195 = vsel %vm194, %v93, %v65
    %v196 = vsel %vm194, %v100, %v72
    %v197 = vsel %vm194, %v107, %v79
    %v198 = vsel %vm194, %v114, %v86
    %203 = vmatprep.subr.mxu0 0.0
    %204 = vmatpush1.msra.mxu0 %v115
    %205 = vmatprep.subr.mxu0 0.0
    %206 = vmatpush1.msra.mxu0 %v116
    %207 = vmatprep.subr.mxu0 0.0
    %208 = vmatpush1.msra.mxu0 %v117
    %209 = vmatprep.subr.mxu0 0.0
    %210 = vmatpush1.msra.mxu0 %v118
    %211 = vmatprep.subr.mxu0 0.0
    %212 = vmatpush1.msra.mxu0 %v119
    %213 = vmatprep.subr.mxu0 0.0
    %214 = vmatpush1.msra.mxu0 %v120
    %215 = vmatprep.subr.mxu0 0.0
    %216 = vmatpush1.msra.mxu0 %v121
    %217 = vmatprep.subr.mxu0 0.0
    %218 = vmatpush1.msra.mxu0 %v122
    %219 = vmatprep.subr.mxu0 0.0
    %220 = vmatpush1.msra.mxu0 %v123
    %221 = vmatprep.subr.mxu0 0.0
    %222 = vmatpush1.msra.mxu0 %v124
    %223 = vmatprep.subr.mxu0 0.0
    %224 = vmatpush1.msra.mxu0 %v125
    %225 = vmatprep.subr.mxu0 0.0
    %226 = vmatpush1.msra.mxu0 %v126
    %227 = vmatprep.subr.mxu0 0.0
    %228 = vmatpush1.msra.mxu0 %v127
    %229 = vmatprep.subr.mxu0 0.0
    %230 = vmatpush1.msra.mxu0 %v128
    %231 = vmatprep.subr.mxu0 0.0
    %232 = vmatpush1.msra.mxu0 %v129
    %233 = vmatprep.subr.mxu0 0.0
    %234 = vmatpush1.msra.mxu0 %v130
    %235 = vmatprep.subr.mxu0 0.0
    %236 = vmatpush1.msra.mxu0 %v131
    %237 = vmatprep.subr.mxu0 0.0
    %238 = vmatpush1.msra.mxu0 %v132
    %239 = vmatprep.subr.mxu0 0.0
    %240 = vmatpush1.msra.mxu0 %v133
    %241 = vmatprep.subr.mxu0 0.0
    %242 = vmatpush1.msra.mxu0 %v134
    %243 = vmatprep.subr.mxu0 0.0
    %244 = vmatpush1.msra.mxu0 %v135
    %245 = vmatprep.subr.mxu0 0.0
    %246 = vmatpush1.msra.mxu0 %v136
    %247 = vmatprep.subr.mxu0 0.0
    %248 = vmatpush1.msra.mxu0 %v137
    %249 = vmatprep.subr.mxu0 0.0
    %250 = vmatpush1.msra.mxu0 %v138
    %251 = vmatprep.subr.mxu0 0.0
    %252 = vmatpush1.msra.mxu0 %v139
    %253 = vmatprep.subr.mxu0 0.0
    %254 = vmatpush1.msra.mxu0 %v140
    %255 = vmatprep.subr.mxu0 0.0
    %256 = vmatpush1.msra.mxu0 %v141
    %257 = vmatprep.subr.mxu0 0.0
    %258 = vmatpush1.msra.mxu0 %v142
    %259 = vmatprep.subr.mxu0 0.0
    %260 = vmatpush1.msra.mxu0 %v143
    %261 = vmatprep.subr.mxu0 0.0
    %262 = vmatpush1.msra.mxu0 %v144
    %263 = vmatprep.subr.mxu0 0.0
    %264 = vmatpush1.msra.mxu0 %v145
    %265 = vmatprep.subr.mxu0 0.0
    %266 = vmatpush1.msra.mxu0 %v146
    %267 = vmatprep.mubr.f32.mxu0 %v196
    %268 = vmatmul.mubr.f32.gmra.mrb[0].mxu0 %v195
    %v269 = vpop.f32.mrb[0].mxu0
    %v270 = vadd.f32 %v184, %v269
    %v271 = vpop.f32.mrb[0].mxu0
    %272 = vdwg.mxu0
    %273 = vmatprep.subr.mxu0 0.0
    %274 = vmatpush1.msra.mxu0 %v147
    %275 = vmatprep.subr.mxu0 0.0
    %276 = vmatpush1.msra.mxu0 %v148
    %277 = vmatprep.subr.mxu0 0.0
    %278 = vmatpush1.msra.mxu0 %v149
    %279 = vmatprep.subr.mxu0 0.0
    %280 = vmatpush1.msra.mxu0 %v150
    %281 = vmatprep.subr.mxu0 0.0
    %282 = vmatpush1.msra.mxu0 %v151
    %283 = vmatprep.subr.mxu0 0.0
    %284 = vmatpush1.msra.mxu0 %v152
    %285 = vmatprep.subr.mxu0 0.0
    %286 = vmatpush1.msra.mxu0 %v153
    %287 = vmatprep.subr.mxu0 0.0
    %288 = vmatpush1.msra.mxu0 %v154
    %289 = vmatprep.subr.mxu0 0.0
    %290 = vmatpush1.msra.mxu0 %v155
    %291 = vmatprep.subr.mxu0 0.0
    %292 = vmatpush1.msra.mxu0 %v156
    %293 = vmatprep.subr.mxu0 0.0
    %294 = vmatpush1.msra.mxu0 %v157
    %295 = vmatprep.subr.mxu0 0.0
    %296 = vmatpush1.msra.mxu0 %v158
    %297 = vmatprep.subr.mxu0 0.0
    %298 = vmatpush1.msra.mxu0 %v159
    %299 = vmatprep.subr.mxu0 0.0
    %300 = vmatpush1.msra.mxu0 %v160
    %301 = vmatprep.subr.mxu0 0.0
    %302 = vmatpush1.msra.mxu0 %v161
    %303 = vmatprep.subr.mxu0 0.0
    %304 = vmatpush1.msra.mxu0 %v162
    %305 = vmatprep.subr.mxu0 0.0
    %306 = vmatpush1.msra.mxu0 %v163
    %307 = vmatprep.subr.mxu0 0.0
    %308 = vmatpush1.msra.mxu0 %v164
    %309 = vmatprep.subr.mxu0 0.0
    %310 = vmatpush1.msra.mxu0 %v165
    %311 = vmatprep.subr.mxu0 0.0
    %312 = vmatpush1.msra.mxu0 %v166
    %313 = vmatprep.subr.mxu0 0.0
    %314 = vmatpush1.msra.mxu0 %v167
    %315 = vmatprep.subr.mxu0 0.0
    %316 = vmatpush1.msra.mxu0 %v168
    %317 = vmatprep.subr.mxu0 0.0
    %318 = vmatpush1.msra.mxu0 %v169
    %319 = vmatprep.subr.mxu0 0.0
    %320 = vmatpush1.msra.mxu0 %v170
    %321 = vmatprep.subr.mxu0 0.0
    %322 = vmatpush1.msra.mxu0 %v171
    %323 = vmatprep.subr.mxu0 0.0
    %324 = vmatpush1.msra.mxu0 %v172
    %325 = vmatprep.subr.mxu0 0.0
    %326 = vmatpush1.msra.mxu0 %v173
    %327 = vmatprep.subr.mxu0 0.0
    %328 = vmatpush1.msra.mxu0 %v174
    %329 = vmatprep.subr.mxu0 0.0
    %330 = vmatpush1.msra.mxu0 %v175
    %331 = vmatprep.subr.mxu0 0.0
    %332 = vmatpush1.msra.mxu0 %v176
    %333 = vmatprep.subr.mxu0 0.0
    %334 = vmatpush1.msra.mxu0 %v177
    %335 = vmatprep.subr.mxu0 0.0
    %336 = vmatpush1.msra.mxu0 %v178
    %337 = vmatprep.mubr.f32.mxu0 %v198
    %338 = vmatmul.mubr.f32.gmra.mrb[0].mxu0 %v197
    %v339 = vpop.f32.mrb[0].mxu0
    %v340 = vadd.f32 %v270, %v339
    %v341 = vpop.f32.mrb[0].mxu0
    %342 = vdwg.mxu0
    %343 = vst [vmem:[#allocation7] sm:$0x3] %v340
    // Predicated region
    $region22: #{tpu_custom_call.1} parent=1 // pred_check
      _
    $region23: #{tpu_custom_call.1} parent=1 // pred_check_branch
      %345 = sbr.rel (0) target = $region25
    $region24: #{tpu_custom_call.1} parent=1 // pred_region
      %s347 = ssub.s32 32, 32
      %348 = vsyncadd [#allocation4], %s347
      %s350 = sshll.u32 [#allocation7], 4
      %s351 = int_to_ptr.vmem [resolvable:$true] %s350
      %353 = dma.vmem_to_hbm [thread:$0]  %s351, 32, %s3, [#allocation4]
    $region25: #{tpu_custom_call.1} parent=1 // pred_fallthru
      _
    // Predicated region
    $region26: #{tpu_custom_call.1} parent=1 // pred_check
      _
    $region27: #{tpu_custom_call.1} parent=1 // pred_check_branch
      %355 = sbr.rel (0) target = $region29
    $region28: #{tpu_custom_call.1} parent=1 // pred_region
      %356 = dma.done [#allocation4], 32
    $region29: #{tpu_custom_call.1} parent=1 // pred_fallthru
      _
    %357 = vsyncpa [#allocation3], 1
    %358 = vsyncpa [#allocation6], 1
    %359 = vsyncpa [#allocation4], 1

</llo_original>
